<compile_context>
chip_gen: v7x
topology: tpu7x:2x2x1
jax: 0.10.0
libtpu: 0.0.40
codegen_flags: <defaults>
</compile_context>

<pallas_src>
import functools

import jax
import jax.numpy as jnp
from jax import lax
from jax.experimental import pallas as pl
from jax.experimental.pallas import tpu as pltpu


_SUB = 8  # sublane-aligned sub-chunk for the in-kernel sequence reduction


def _readout_kernel(x_ref, w_ref, p_ref, o_ref, acc_ref, *, seq_len, dout):
    # x_ref:   (TB, TS, Din)   streamed input chunk (bf16 or f32)
    # w_ref:   (Din, Dp)       dense weight, transposed + zero-padded cols (bf16)
    # p_ref:   (3, Dp)         row 0 = bias, 1 = gamma, 2 = beta (f32)
    # o_ref:   (TB, Dp)        output tile (lane-dense, padded) (f32)
    # acc_ref: (TB, Din) f32   running sum over the sequence axis
    s = pl.program_id(1)

    @pl.when(s == 0)
    def _():
        acc_ref[...] = jnp.zeros_like(acc_ref)

    # Chunked sequence reduction: upcast only _SUB sublane rows at a time so
    # the f32 temporary stays (TB, _SUB, Din) no matter how large TS is.
    ts = x_ref.shape[1]
    n_sub = ts // _SUB

    def _accumulate(t, carry):
        start = pl.multiple_of(t * _SUB, _SUB)
        chunk = x_ref[:, pl.ds(start, _SUB), :].astype(jnp.float32)
        acc_ref[...] += jnp.sum(chunk, axis=1)
        return carry

    lax.fori_loop(0, n_sub, _accumulate, 0, unroll=(n_sub <= 4))

    @pl.when(s == pl.num_programs(1) - 1)
    def _():
        # Mean over the *real* (unpadded) sequence length.
        agg = acc_ref[...] * jnp.float32(1.0 / seq_len)               # (TB, Din)

        # dense: agg @ W^T + b  -- native bf16 MXU path, f32 accumulation.
        y = jnp.dot(agg.astype(w_ref.dtype), w_ref[...],
                    preferred_element_type=jnp.float32)               # (TB, Dp)

        params = p_ref[...]
        bias, gamma, beta = params[0:1, :], params[1:2, :], params[2:3, :]
        y = y + bias

        # LayerNorm over the real Dout lanes only (padded lanes excluded).
        dp = y.shape[-1]
        inv_d = jnp.float32(1.0 / dout)
        if dout != dp:
            lane = lax.broadcasted_iota(jnp.int32, y.shape, 1)
            mask = lane < dout
            y = jnp.where(mask, y, 0.0)
            mu = jnp.sum(y, axis=-1, keepdims=True) * inv_d
            centered = jnp.where(mask, y - mu, 0.0)
        else:
            mu = jnp.sum(y, axis=-1, keepdims=True) * inv_d
            centered = y - mu
        var = jnp.sum(centered * centered, axis=-1, keepdims=True) * inv_d
        out = centered * lax.rsqrt(var + jnp.float32(1e-5)) * gamma + beta
        o_ref[...] = out.astype(o_ref.dtype)


def _round_up(x, m):
    return ((x + m - 1) // m) * m


def _vmem_capacity_bytes():
    try:
        cap = getattr(pltpu.get_tpu_info(), "vmem_capacity_bytes", None)
        if cap:
            return int(cap)
    except Exception:
        pass
    return 64 * 1024 * 1024  # conservative (v7x) fallback


def _select_tiles(B, S, Din, Dp, x_itemsize, budget):
    """Jointly pick (TB, TS) so every buffer fits the scoped-VMEM budget."""
    B8 = _round_up(max(B, 1), 8)
    S8 = _round_up(max(S, 1), 8)
    fixed = 2 * Din * Dp * 2 + 2 * 8 * Dp * 4     # W (bf16) + fused params
    # Prefer >=2 batch blocks (so "parallel" can shard over v7x's 2 TCs).
    tb = min(256, _round_up(B8 // 2, 8)) if B8 >= 16 else B8
    while True:
        per_tb = (2 * tb * Dp * 4           # output tile, double-buffered
                  + tb * Din * 4            # f32 accumulator scratch
                  + tb * _SUB * Din * 4)    # bounded f32 upcast temporary
        rem = budget - fixed - per_tb
        row = 2 * tb * Din * x_itemsize     # one TS sublane row, double-buffered
        if rem >= 8 * row or tb <= 8:
            ts_budget = max(8, (rem // row) // 8 * 8) if rem >= 8 * row else 8
            ts_abs = max(8, ((24 << 20) // (tb * Din * x_itemsize)) // 8 * 8)
            ts = int(min(S8, ts_budget, ts_abs))
            # Re-balance so S padding waste is minimal for this block count.
            n_s = -(-S8 // ts)
            ts = _round_up(-(-S8 // n_s), 8)
            return tb, ts
        tb = max(8, _round_up(tb // 2, 8))


def readout_layer(spike_sequence, weight, bias, gamma, beta,
                  *, stream_dtype=jnp.bfloat16):
    """spike_sequence: [B, S, Din]; weight: [Dout, Din] (PyTorch layout);
    bias/gamma/beta: [Dout].  Returns [B, Dout] float32."""
    B, S, Din = spike_sequence.shape
    Dout = weight.shape[0]
    Dp = _round_up(Dout, 128)                 # lane-dense padded output width

    # Halve HBM traffic on the dominant [B,S,Din] stream (spikes are 0/1 ->
    # exact in bf16); under jit this cast fuses into the upstream producer.
    x = spike_sequence
    if stream_dtype is not None and x.dtype != stream_dtype:
        x = x.astype(stream_dtype)
    itemsize = jnp.dtype(x.dtype).itemsize

    # Lane-dense, zero-padded parameters. W stays bf16 (native MXU input,
    # half the resident VMEM); bias/gamma/beta fused into one small f32 array.
    w_t = jnp.pad(weight.T, ((0, 0), (0, Dp - Dout))).astype(jnp.bfloat16)
    params = jnp.pad(jnp.stack([bias, gamma, beta]).astype(jnp.float32),
                     ((0, 0), (0, Dp - Dout)))                     # (3, Dp)

    # Per-generation VMEM budget: v5e/v6e (128 MiB) -> ~96 MiB; v7x (64) -> ~48.
    phys = _vmem_capacity_bytes()
    budget = max(32 << 20, int(min(phys * 0.75, 96 << 20)))

    TB, TS = _select_tiles(B, S, Din, Dp, itemsize, budget)

    # Re-balance TB so batch padding waste is minimal for this block count.
    B8 = _round_up(B, 8)
    n_b = -(-B8 // TB)
    TB = _round_up(-(-B8 // n_b), 8)
    Bp = n_b * TB
    n_s = -(-_round_up(S, 8) // TS)
    Sp = n_s * TS

    # Zero-pad batch / sequence to tile multiples (exact for the sum; the mean
    # divides by the real S, and padded batch rows are sliced off below).
    if (Bp, Sp) != (B, S):
        x = jnp.pad(x, ((0, Bp - B), (0, Sp - S), (0, 0)))

    est = (2 * Din * Dp * 2 + 2 * 8 * Dp * 4
           + 2 * TB * Dp * 4 + TB * Din * 4 + TB * _SUB * Din * 4
           + 2 * TB * TS * Din * itemsize)
    vmem_limit = int(min(phys - (2 << 20), max(budget, est + (8 << 20))))

    kernel = functools.partial(_readout_kernel, seq_len=S, dout=Dout)

    out_padded = pl.pallas_call(
        kernel,
        out_shape=jax.ShapeDtypeStruct((Bp, Dp), jnp.float32),
        grid_spec=pltpu.PrefetchScalarGridSpec(
            num_scalar_prefetch=0,
            grid=(n_b, n_s),
            in_specs=[
                pl.BlockSpec((TB, TS, Din), lambda b, s: (b, s, 0)),
                # Constant index maps: Pallas DMAs these only once.
                # TODO(synk): use pipeline_mode=pl.Buffered(1) for W/params once
                # single-buffered resident inputs are universally supported.
                pl.BlockSpec((Din, Dp), lambda b, s: (0, 0)),
                pl.BlockSpec((3, Dp), lambda b, s: (0, 0)),
            ],
            out_specs=pl.BlockSpec((TB, Dp), lambda b, s: (b, 0)),
            scratch_shapes=[pltpu.VMEM((TB, Din), jnp.float32)],
        ),
        compiler_params=pltpu.CompilerParams(
            dimension_semantics=("parallel", "arbitrary"),
            vmem_limit_bytes=vmem_limit),
    )(x, w_t, params)

    return out_padded[:B, :Dout]


def _reference(spike_sequence, weight, bias, gamma, beta):
    agg = jnp.mean(spike_sequence.astype(jnp.float32), axis=1)
    y = agg @ weight.T + bias
    mu = jnp.mean(y, axis=-1, keepdims=True)
    var = jnp.mean((y - mu) ** 2, axis=-1, keepdims=True)
    return (y - mu) / jnp.sqrt(var + 1e-5) * gamma + beta


if __name__ == "__main__":
    # Small shapes consistent with forward(): [batch, seq, input_dim]
    B, S, Din, Dout = 2, 8, 32, 16

    key = jax.random.PRNGKey(0)
    kx, kw = jax.random.split(key)

    # 0/1 spike train (exact in bf16), matching the module's input semantics.
    x = jax.random.bernoulli(kx, p=0.3, shape=(B, S, Din)).astype(jnp.float32)

    # Deterministic parameter init mirroring the module's __init__:
    #   xavier_normal_ weights, zero bias, LayerNorm gamma=1 / beta=0.
    xavier_std = (2.0 / (Din + Dout)) ** 0.5
    weight = xavier_std * jax.random.normal(kw, (Dout, Din), dtype=jnp.float32)
    bias = jnp.zeros((Dout,), dtype=jnp.float32)
    gamma = jnp.ones((Dout,), dtype=jnp.float32)
    beta = jnp.zeros((Dout,), dtype=jnp.float32)

    out = jax.block_until_ready(readout_layer(x, weight, bias, gamma, beta))
    ref = _reference(x, weight, bias, gamma, beta)

    assert out.shape == (B, Dout)
    # bf16 x-stream / bf16 W matmul inputs (f32 accumulation) -> relaxed tol.
    assert jnp.allclose(out, ref, atol=3e-2, rtol=3e-2), "mismatch vs reference"

    print("KERNEL_OK")
</pallas_src>

<mosaic_0001>
module attributes {stable_mosaic.version = 11 : i64} {
  func.func @_readout_kernel(%arg0: i32, %arg1: i32, %arg2: memref<8x8x32xbf16, #tpu.memory_space<vmem>>, %arg3: memref<32x128xbf16, #tpu.memory_space<vmem>>, %arg4: memref<3x128xf32, #tpu.memory_space<vmem>>, %arg5: memref<8x128xf32, #tpu.memory_space<vmem>>, %arg6: memref<8x32xf32, #tpu.memory_space<vmem>>) attributes {dimension_semantics = [#tpu.dimension_semantics<parallel>, #tpu.dimension_semantics<arbitrary>], iteration_bounds = array<i64: 1, 1>, scalar_prefetch = 0 : i64, scratch_operands = 1 : i64, tpu.core_type = #tpu.core_type<tc>, window_params = [{transform_indices = @transform_0, window_bounds = array<i64: 8, 8, 32>}, {pipeline_mode = #tpu.pipeline_mode<synchronous>, transform_indices = @transform_1, window_bounds = array<i64: 32, 128>}, {pipeline_mode = #tpu.pipeline_mode<synchronous>, transform_indices = @transform_2, window_bounds = array<i64: 3, 128>}, {transform_indices = @transform_3, window_bounds = array<i64: 8, 128>}]} {
    %c0_i32 = arith.constant 0 : i32
    %0 = arith.cmpi eq, %arg1, %c0_i32 : i32
    %1 = arith.extui %0 : i1 to i32
    %c0_i32_0 = arith.constant 0 : i32
    %2 = arith.cmpi ne, %1, %c0_i32_0 : i32
    scf.if %2 {
      %cst_9 = arith.constant 0.000000e+00 : f32
      %15 = vector.broadcast %cst_9 : f32 to vector<8x32xf32>
      %c0_10 = arith.constant 0 : index
      %c0_11 = arith.constant 0 : index
      %16 = vector.load %arg6[%c0_10, %c0_11] : memref<8x32xf32, #tpu.memory_space<vmem>>, vector<8x32xf32>
      tpu.vector_store %arg6[%c0_10, %c0_11], %15 {strides = array<i32>} : memref<8x32xf32, #tpu.memory_space<vmem>>, vector<8x32xf32>,
    } else {
    }
    %c0_i32_1 = arith.constant 0 : i32
    %c8_i32 = arith.constant 8 : i32
    %3 = arith.muli %c0_i32_1, %c8_i32 : i32
    %4 = tpu.assume_multiple %3, 8 : i32
    %c0 = arith.constant 0 : index
    %5 = arith.index_cast %4 : i32 to index
    %c0_2 = arith.constant 0 : index
    %6 = vector.load %arg2[%c0, %5, %c0_2] : memref<8x8x32xbf16, #tpu.memory_space<vmem>>, vector<8x8x32xbf16>
    %7 = arith.extf %6 : vector<8x8x32xbf16> to vector<8x8x32xf32>
    %c0_3 = arith.constant 0 : index
    %c0_4 = arith.constant 0 : index
    %8 = vector.load %arg6[%c0_3, %c0_4] : memref<8x32xf32, #tpu.memory_space<vmem>>, vector<8x32xf32>
    %cst = arith.constant dense<0.000000e+00> : vector<8x32xf32>
    %9 = vector.multi_reduction <add>, %7, %cst [1] : vector<8x8x32xf32> to vector<8x32xf32>
    %10 = arith.addf %8, %9 : vector<8x32xf32>
    %c0_5 = arith.constant 0 : index
    %c0_6 = arith.constant 0 : index
    %11 = vector.load %arg6[%c0_5, %c0_6] : memref<8x32xf32, #tpu.memory_space<vmem>>, vector<8x32xf32>
    tpu.vector_store %arg6[%c0_5, %c0_6], %10 {strides = array<i32>} : memref<8x32xf32, #tpu.memory_space<vmem>>, vector<8x32xf32>,
    %c1_i32 = arith.constant 1 : i32
    %c0_i32_7 = arith.constant 0 : i32
    %12 = arith.cmpi eq, %arg1, %c0_i32_7 : i32
    %13 = arith.extui %12 : i1 to i32
    %c0_i32_8 = arith.constant 0 : i32
    %14 = arith.cmpi ne, %13, %c0_i32_8 : i32
    scf.if %14 {
      %c0_9 = arith.constant 0 : index
      %c0_10 = arith.constant 0 : index
      %15 = vector.load %arg6[%c0_9, %c0_10] : memref<8x32xf32, #tpu.memory_space<vmem>>, vector<8x32xf32>
      %cst_11 = arith.constant 1.250000e-01 : f32
      %16 = vector.broadcast %cst_11 : f32 to vector<8x32xf32>
      %17 = arith.mulf %15, %16 : vector<8x32xf32>
      %18 = arith.truncf %17 : vector<8x32xf32> to vector<8x32xbf16>
      %c0_12 = arith.constant 0 : index
      %c0_13 = arith.constant 0 : index
      %19 = vector.load %arg3[%c0_12, %c0_13] : memref<32x128xbf16, #tpu.memory_space<vmem>>, vector<32x128xbf16>
      %cst_14 = arith.constant dense<0.000000e+00> : vector<8x128xf32>
      %20 = tpu.matmul %18, %19, %cst_14 {dimension_numbers = #tpu.dot_dimension_numbers<[1], [0], [0], [1], [0, 0, 1, 1], [], []>} : vector<8x32xbf16>, vector<32x128xbf16>, vector<8x128xf32> -> vector<8x128xf32>
      %c0_15 = arith.constant 0 : index
      %c0_16 = arith.constant 0 : index
      %21 = vector.load %arg4[%c0_15, %c0_16] : memref<3x128xf32, #tpu.memory_space<vmem>>, vector<3x128xf32>
      %22 = vector.extract_strided_slice %21 {offsets = [0, 0], sizes = [1, 128], strides = [1, 1]} : vector<3x128xf32> to vector<1x128xf32>
      %23 = vector.extract_strided_slice %21 {offsets = [1, 0], sizes = [1, 128], strides = [1, 1]} : vector<3x128xf32> to vector<1x128xf32>
      %24 = vector.extract_strided_slice %21 {offsets = [2, 0], sizes = [1, 128], strides = [1, 1]} : vector<3x128xf32> to vector<1x128xf32>
      %25 = vector.broadcast %22 : vector<1x128xf32> to vector<8x128xf32>
      %26 = arith.addf %20, %25 : vector<8x128xf32>
      %27 = tpu.iota {dimensions = array<i32: 1>} : vector<8x128xi32>
      %c16_i32 = arith.constant 16 : i32
      %28 = vector.broadcast %c16_i32 : i32 to vector<8x128xi32>
      %29 = arith.cmpi slt, %27, %28 : vector<8x128xi32>
      %cst_17 = arith.constant 0.000000e+00 : f32
      %30 = vector.broadcast %cst_17 : f32 to vector<8x128xf32>
      %31 = arith.select %29, %26, %30 : vector<8x128xi1>, vector<8x128xf32>
      %cst_18 = arith.constant dense<0.000000e+00> : vector<8xf32>
      %32 = vector.multi_reduction <add>, %31, %cst_18 [1] : vector<8x128xf32> to vector<8xf32>
      %33 = vector.shape_cast %32 : vector<8xf32> to vector<8x1xf32>
      %cst_19 = arith.constant 6.250000e-02 : f32
      %34 = vector.broadcast %cst_19 : f32 to vector<8x1xf32>
      %35 = arith.mulf %33, %34 : vector<8x1xf32>
      %36 = vector.broadcast %35 : vector<8x1xf32> to vector<8x128xf32>
      %37 = arith.subf %31, %36 : vector<8x128xf32>
      %cst_20 = arith.constant 0.000000e+00 : f32
      %38 = vector.broadcast %cst_20 : f32 to vector<8x128xf32>
      %39 = arith.select %29, %37, %38 : vector<8x128xi1>, vector<8x128xf32>
      %40 = arith.mulf %39, %39 : vector<8x128xf32>
      %cst_21 = arith.constant dense<0.000000e+00> : vector<8xf32>
      %41 = vector.multi_reduction <add>, %40, %cst_21 [1] : vector<8x128xf32> to vector<8xf32>
      %42 = vector.shape_cast %41 : vector<8xf32> to vector<8x1xf32>
      %cst_22 = arith.constant 6.250000e-02 : f32
      %43 = vector.broadcast %cst_22 : f32 to vector<8x1xf32>
      %44 = arith.mulf %42, %43 : vector<8x1xf32>
      %cst_23 = arith.constant 9.99999974E-6 : f32
      %45 = vector.broadcast %cst_23 : f32 to vector<8x1xf32>
      %46 = arith.addf %44, %45 : vector<8x1xf32>
      %47 = math.rsqrt %46 : vector<8x1xf32>
      %48 = vector.broadcast %47 : vector<8x1xf32> to vector<8x128xf32>
      %49 = arith.mulf %39, %48 : vector<8x128xf32>
      %50 = vector.broadcast %23 : vector<1x128xf32> to vector<8x128xf32>
      %51 = arith.mulf %49, %50 : vector<8x128xf32>
      %52 = vector.broadcast %24 : vector<1x128xf32> to vector<8x128xf32>
      %53 = arith.addf %51, %52 : vector<8x128xf32>
      %c0_24 = arith.constant 0 : index
      %c0_25 = arith.constant 0 : index
      %54 = vector.load %arg5[%c0_24, %c0_25] : memref<8x128xf32, #tpu.memory_space<vmem>>, vector<8x128xf32>
      tpu.vector_store %arg5[%c0_24, %c0_25], %53 {strides = array<i32>} : memref<8x128xf32, #tpu.memory_space<vmem>>, vector<8x128xf32>,
    } else {
    }
    return
  }
  func.func @transform_0(%arg0: i32, %arg1: i32) -> (i32, i32, i32) {
    %c0_i32 = arith.constant 0 : i32
    %c0_i32_0 = arith.constant 0 : i32
    return %arg0, %arg1, %c0_i32 : i32, i32, i32
  }
  func.func @transform_1(%arg0: i32, %arg1: i32) -> (i32, i32) {
    %c0_i32 = arith.constant 0 : i32
    %c0_i32_0 = arith.constant 0 : i32
    %c0_i32_1 = arith.constant 0 : i32
    return %c0_i32, %c0_i32_0 : i32, i32
  }
  func.func @transform_2(%arg0: i32, %arg1: i32) -> (i32, i32) {
    %c0_i32 = arith.constant 0 : i32
    %c0_i32_0 = arith.constant 0 : i32
    %c0_i32_1 = arith.constant 0 : i32
    return %c0_i32, %c0_i32_0 : i32, i32
  }
  func.func @transform_3(%arg0: i32, %arg1: i32) -> (i32, i32) {
    %c0_i32 = arith.constant 0 : i32
    %c0_i32_0 = arith.constant 0 : i32
    return %arg0, %c0_i32 : i32, i32
  }
}

</mosaic_0001>

<llo_original>
// kernel: tpu_custom_call.1
$region0: #{tpu_custom_call.1}
  #allocation0 [shape = 'u32[]', space=smem, size = 0x4, offset = 0x4, fixed_abs, tag = 'smem constant byte address 0x4 - core index']
  #allocation1 [shape = 'u32[144,128]{1,0:T(1,128)}', space=vmem, size = 0x12000, scoped, tag = 'internal scratch']
  #allocation2 [shape = 'f32[8,32]{1,0:T(8,128)}', space=vmem, size = 0x1000, scoped, tag = 'scratch operand']
  %s0 = inlined_call_operand.hbm [shape: bf16[8,8,32], index: 0, kind: input, shape index: {}]
  %s1 = inlined_call_operand.hbm [shape: bf16[32,128], index: 1, kind: input, shape index: {}]
  %s2 = inlined_call_operand.vmem [shape: f32[3,128], index: 2, kind: input, shape index: {}]
  %s3 = inlined_call_operand.hbm [shape: f32[8,128], index: 3, kind: output, shape index: {}]
  %s4 = sld [smem:[#allocation0]]
  $region38: #{tpu_custom_call.1} parent=0
    _
  %s6 = ssub.s32 1, %s4
  %s7 = scalar_select 0, %s6, %s4
  $region1: #{tpu_custom_call.1} parent=0
    #allocation3 [shape = 'u8[16384]{0}', space=vmem, size = 0x4000, scoped, tag = 'input window, operand 0, single buffered']
    #allocation4 [shape = 's32[1]{0}', space=sflag, size = 0x4, scoped, tag = 'scoped memory for tpu_custom_call.1']
    #allocation5 [shape = 's32[1]{0}', space=sflag, size = 0x4, scoped, tag = 'scoped memory for tpu_custom_call.1']
    #allocation6 [shape = 'u8[8192]{0}', space=vmem, size = 0x2000, scoped, tag = 'input window, operand 1, single buffered']
    #allocation7 [shape = 's32[1]{0}', space=sflag, size = 0x4, scoped, tag = 'scoped memory for tpu_custom_call.1']
    #allocation8 [shape = 'u8[4096]{0}', space=vmem, size = 0x1000, scoped, tag = 'output window, operand 0, single buffered']
    %8 = vsyncpa [#allocation4], 0
    %9 = vsyncpa [#allocation7], 0
    %10 = vsyncpa [#allocation5], 0
    // Predicated region
    $region2: #{tpu_custom_call.1} parent=1 // pred_check
      _
    $region3: #{tpu_custom_call.1} parent=1 // pred_check_branch
      %12 = sbr.rel (0) target = $region5
    $region4: #{tpu_custom_call.1} parent=1 // pred_region
      %s14 = ssub.s32 512, 512
      %15 = vsyncadd [#allocation4], %s14
      %s16 = sshll.u32 [#allocation3], 4
      %s17 = int_to_ptr.vmem [resolvable:$true] %s16
      %22 = dma.hbm_to_vmem [thread:$0]  %s0, 512, %s17, [#allocation4], 64, 64, 4
    $region5: #{tpu_custom_call.1} parent=1 // pred_fallthru
      _
    // Predicated region
    $region6: #{tpu_custom_call.1} parent=1 // pred_check
      _
    $region7: #{tpu_custom_call.1} parent=1 // pred_check_branch
      %24 = sbr.rel (0) target = $region9
    $region8: #{tpu_custom_call.1} parent=1 // pred_region
      %s26 = ssub.s32 256, 256
      %27 = vsyncadd [#allocation7], %s26
      %s28 = sshll.u32 [#allocation6], 4
      %s29 = int_to_ptr.vmem [resolvable:$true] %s28
      %34 = dma.hbm_to_vmem [thread:$0]  %s1, 256, %s29, [#allocation7], 64, 64, 4
    $region9: #{tpu_custom_call.1} parent=1 // pred_fallthru
      _
    // Predicated region
    $region10: #{tpu_custom_call.1} parent=1 // pred_check
      _
    $region11: #{tpu_custom_call.1} parent=1 // pred_check_branch
      %36 = sbr.rel (0) target = $region13
    $region12: #{tpu_custom_call.1} parent=1 // pred_region
      _
    $region13: #{tpu_custom_call.1} parent=1 // pred_fallthru
      _
    // Predicated region
    $region14: #{tpu_custom_call.1} parent=1 // pred_check
      _
    $region15: #{tpu_custom_call.1} parent=1 // pred_check_branch
      %38 = sbr.rel (0) target = $region17
    $region16: #{tpu_custom_call.1} parent=1 // pred_region
      %39 = dma.done [#allocation4], 512
    $region17: #{tpu_custom_call.1} parent=1 // pred_fallthru
      _
    // Predicated region
    $region18: #{tpu_custom_call.1} parent=1 // pred_check
      _
    $region19: #{tpu_custom_call.1} parent=1 // pred_check_branch
      %41 = sbr.rel (0) target = $region21
    $region20: #{tpu_custom_call.1} parent=1 // pred_region
      %42 = dma.done [#allocation7], 256
    $region21: #{tpu_custom_call.1} parent=1 // pred_fallthru
      _
    %p44 = scmp.eq.s32.totalorder 0, 0
    // Predicated region
    $region22: #{tpu_custom_call.1} parent=1 // pred_check
      %p45 = pneg %p44
    $region23: #{tpu_custom_call.1} parent=1 // pred_check_branch
      %47 = sbr.rel (%p45) target = $region25
    $region24: #{tpu_custom_call.1} parent=1 // pred_region
      %vm48 = vcmask 261120
      %49 = vst.msk [vmem:[#allocation2] sm:$0xff] %vm48, 0.0
    $region25: #{tpu_custom_call.1} parent=1 // pred_fallthru
      _
    %v50 = vld [vmem:[#allocation3] sm:$0xf]
    %v51 = vld [vmem:[#allocation3 + $0x4] sm:$0xf]
    %v52 = vld [vmem:[#allocation3 + $0x8] sm:$0xf]
    %v53 = vld [vmem:[#allocation3 + $0xc] sm:$0xf]
    %v54 = vld [vmem:[#allocation3 + $0x10] sm:$0xf]
    %v55 = vld [vmem:[#allocation3 + $0x14] sm:$0xf]
    %v56 = vld [vmem:[#allocation3 + $0x18] sm:$0xf]
    %v57 = vld [vmem:[#allocation3 + $0x1c] sm:$0xf]
    %v58 = vunpack.c.l.bf16 %v50
    %v59 = vunpack.c.l.bf16 %v51
    %v60 = vunpack.c.l.bf16 %v52
    %v61 = vunpack.c.l.bf16 %v53
    %v62 = vunpack.c.l.bf16 %v54
    %v63 = vunpack.c.l.bf16 %v55
    %v64 = vunpack.c.l.bf16 %v56
    %v65 = vunpack.c.l.bf16 %v57
    %v66 = vld [vmem:[#allocation2] sm:$0xff]
    %vm67 = vcmask 261120
    %v68 = vsel %vm67, %v58, 0.0
    %v69 = vrot.slane %v68, 4
    %v70 = vadd.f32 %v68, %v69
    %v71 = vrot.slane %v70, 2
    %v72 = vadd.f32 %v70, %v71
    %v73 = vrot.slane %v72, 1
    %v74 = vadd.f32 %v72, %v73
    %v75 = vsel %vm67, %v59, 0.0
    %v76 = vrot.slane %v75, 4
    %v77 = vadd.f32 %v75, %v76
    %v78 = vrot.slane %v77, 2
    %v79 = vadd.f32 %v77, %v78
    %v80 = vrot.slane %v79, 1
    %v81 = vadd.f32 %v79, %v80
    %v82 = vsel %vm67, %v60, 0.0
    %v83 = vrot.slane %v82, 4
    %v84 = vadd.f32 %v82, %v83
    %v85 = vrot.slane %v84, 2
    %v86 = vadd.f32 %v84, %v85
    %v87 = vrot.slane %v86, 1
    %v88 = vadd.f32 %v86, %v87
    %v89 = vsel %vm67, %v61, 0.0
    %v90 = vrot.slane %v89, 4
    %v91 = vadd.f32 %v89, %v90
    %v92 = vrot.slane %v91, 2
    %v93 = vadd.f32 %v91, %v92
    %v94 = vrot.slane %v93, 1
    %v95 = vadd.f32 %v93, %v94
    %v96 = vsel %vm67, %v62, 0.0
    %v97 = vrot.slane %v96, 4
    %v98 = vadd.f32 %v96, %v97
    %v99 = vrot.slane %v98, 2
    %v100 = vadd.f32 %v98, %v99
    %v101 = vrot.slane %v100, 1
    %v102 = vadd.f32 %v100, %v101
    %v103 = vsel %vm67, %v63, 0.0
    %v104 = vrot.slane %v103, 4
    %v105 = vadd.f32 %v103, %v104
    %v106 = vrot.slane %v105, 2
    %v107 = vadd.f32 %v105, %v106
    %v108 = vrot.slane %v107, 1
    %v109 = vadd.f32 %v107, %v108
    %v110 = vsel %vm67, %v64, 0.0
    %v111 = vrot.slane %v110, 4
    %v112 = vadd.f32 %v110, %v111
    %v113 = vrot.slane %v112, 2
    %v114 = vadd.f32 %v112, %v113
    %v115 = vrot.slane %v114, 1
    %v116 = vadd.f32 %v114, %v115
    %v117 = vsel %vm67, %v65, 0.0
    %v118 = vrot.slane %v117, 4
    %v119 = vadd.f32 %v117, %v118
    %v120 = vrot.slane %v119, 2
    %v121 = vadd.f32 %v119, %v120
    %v122 = vrot.slane %v121, 1
    %v123 = vadd.f32 %v121, %v122
    %vm132 = vcmask 1041409
    %v133 = vsel %vm132, %v81, %v74
    %vm134 = vcmask 1042434
    %v135 = vsel %vm134, %v88, %v133
    %vm136 = vcmask 1043459
    %v137 = vsel %vm136, %v95, %v135
    %vm138 = vcmask 1044484
    %v139 = vsel %vm138, %v102, %v137
    %vm140 = vcmask 1045509
    %v141 = vsel %vm140, %v109, %v139
    %vm142 = vcmask 1046534
    %v143 = vsel %vm142, %v116, %v141
    %vm144 = vcmask 1047559
    %v145 = vsel %vm144, %v123, %v143
    %v147 = vadd.f32 %v66, %v145
    %148 = vst.msk [vmem:[#allocation2] sm:$0xff] %vm67, %v147
    // Predicated region
    $region26: #{tpu_custom_call.1} parent=1 // pred_check
      %p149 = pneg %p44
    $region27: #{tpu_custom_call.1} parent=1 // pred_check_branch
      %151 = sbr.rel (%p149) target = $region29
    $region28: #{tpu_custom_call.1} parent=1 // pred_region
      %v152 = vld [vmem:[#allocation2] sm:$0xff]
      %v153 = vmul.f32 %v152, 0.125
      %v154 = vpack.c.bf16 %v153, %v153
      %v155 = vld [vmem:[#allocation6] sm:$0xf]
      %v156 = vld [vmem:[#allocation6 + $0x4] sm:$0xf]
      %v157 = vld [vmem:[#allocation6 + $0x8] sm:$0xf]
      %v158 = vld [vmem:[#allocation6 + $0xc] sm:$0xf]
      %v159 = vld [vmem:[%s2] sm:$0x7]
      %v160 = vlaneseq
      %v161 = vshrl.u32 %v160, 7
      %v162 = vsub.s32 0, %v161
      %v163 = vrot.slane %v159, %v162
      %v168 = vunpack.c.l.b16 %v155
      %v169 = vunpack.c.l.b16 %v156
      %v170 = vunpack.c.l.b16 %v157
      %v171 = vunpack.c.l.b16 %v158
      %v172 = vpack.c.b16 %v169, %v168
      %v173 = vpack.c.b16 %v171, %v170
      %v177 = vsel %vm67, %v154, 0
      %179 = vmatprep.subr.bf16.mxu0 0
      %180 = vmatpush1.bf16.msra.mxu0 %v172
      %181 = vmatprep.subr.bf16.mxu0 0
      %182 = vmatpush1.bf16.msra.mxu0 %v173
      %183 = vmatprep.subr.bf16.mxu0 0
      %184 = vmatpush1.bf16.msra.mxu0 0
      %185 = vmatprep.subr.bf16.mxu0 0
      %186 = vmatpush1.bf16.msra.mxu0 0
      %187 = vmatprep.subr.bf16.mxu0 0
      %188 = vmatpush1.bf16.msra.mxu0 0
      %189 = vmatprep.subr.bf16.mxu0 0
      %190 = vmatpush1.bf16.msra.mxu0 0
      %191 = vmatprep.subr.bf16.mxu0 0
      %192 = vmatpush1.bf16.msra.mxu0 0
      %193 = vmatprep.subr.bf16.mxu0 0
      %194 = vmatpush1.bf16.msra.mxu0 0
      %195 = vmatprep.subr.bf16.mxu0 0
      %196 = vmatpush1.bf16.msra.mxu0 0
      %197 = vmatprep.subr.bf16.mxu0 0
      %198 = vmatpush1.bf16.msra.mxu0 0
      %199 = vmatprep.subr.bf16.mxu0 0
      %200 = vmatpush1.bf16.msra.mxu0 0
      %201 = vmatprep.subr.bf16.mxu0 0
      %202 = vmatpush1.bf16.msra.mxu0 0
      %203 = vmatprep.subr.bf16.mxu0 0
      %204 = vmatpush1.bf16.msra.mxu0 0
      %205 = vmatprep.subr.bf16.mxu0 0
      %206 = vmatpush1.bf16.msra.mxu0 0
      %207 = vmatprep.subr.bf16.mxu0 0
      %208 = vmatpush1.bf16.msra.mxu0 0
      %209 = vmatprep.subr.bf16.mxu0 0
      %210 = vmatpush1.bf16.msra.mxu0 0
      %211 = vmatprep.mubr.bf16.mxu0 0
      %212 = vmatmul.mubr.bf16.gmra.mrb[0].mxu0 %v177
      %v213 = vpop.f32.mrb[0].mxu0
      %v214 = vadd.f32 %v163, %v213
      %v215 = vpop.f32.mrb[0].mxu0
      %v216 = vpop.f32.mrb[0].mxu0
      %v217 = vpop.f32.mrb[0].mxu0
      %218 = vdwg.mxu0
      %v219 = vlaneseq
      %v220 = vand.u32 %v219, 127
      %vm221 = vcmp.lt.s32.totalorder %v220, 16
      %v222 = vsel %vm221, %v214, 0.0
      %223 = vadd.xlane.f32.xlu0 %v222
      %v224 = vpop.xlane.xlu0 %223
      %v225 = vmul.f32 %v224, 0.0625
      %v226 = vsub.f32 %v222, %v225
      %v227 = vsel %vm221, %v226, 0.0
      %v228 = vmul.f32 %v227, %v227
      %229 = vadd.xlane.f32.xlu0 %v228
      %v230 = vpop.xlane.xlu0 %229
      %v231 = vmul.f32 %v230, 0.0625
      %v232 = vadd.f32 %v231, 1e-05
      %v233 = vrsqrt.pop %v232
      %v234 = vmul.f32 %v227, %v233
      %v235 = vlaneseq
      %v236 = vshrl.u32 %v235, 7
      %v237 = vsub.s32 1, %v236
      %v238 = vrot.slane %v159, %v237
      %v239 = vmul.f32 %v234, %v238
      %v240 = vlaneseq
      %v241 = vshrl.u32 %v240, 7
      %v242 = vsub.s32 2, %v241
      %v243 = vrot.slane %v159, %v242
      %v244 = vadd.f32 %v239, %v243
      %245 = vst [vmem:[#allocation8] sm:$0xff] %v244
    $region29: #{tpu_custom_call.1} parent=1 // pred_fallthru
      _
    // Predicated region
    $region30: #{tpu_custom_call.1} parent=1 // pred_check
      _
    $region31: #{tpu_custom_call.1} parent=1 // pred_check_branch
      %247 = sbr.rel (0) target = $region33
    $region32: #{tpu_custom_call.1} parent=1 // pred_region
      %s249 = ssub.s32 128, 128
      %250 = vsyncadd [#allocation5], %s249
      %s252 = sshll.u32 [#allocation8], 4
      %s253 = int_to_ptr.vmem [resolvable:$true] %s252
      %255 = dma.vmem_to_hbm [thread:$0]  %s253, 128, %s3, [#allocation5]
    $region33: #{tpu_custom_call.1} parent=1 // pred_fallthru
      _
    // Predicated region
    $region34: #{tpu_custom_call.1} parent=1 // pred_check
      _
    $region35: #{tpu_custom_call.1} parent=1 // pred_check_branch
      %257 = sbr.rel (0) target = $region37
    $region36: #{tpu_custom_call.1} parent=1 // pred_region
      %258 = dma.done [#allocation5], 128
    $region37: #{tpu_custom_call.1} parent=1 // pred_fallthru
      _
    %259 = vsyncpa [#allocation4], 1
    %260 = vsyncpa [#allocation7], 1
    %261 = vsyncpa [#allocation5], 1

</llo_original>
